<compile_context>
chip_gen: v7x
topology: tpu7x:2x2x1
jax: 0.10.0
libtpu: 0.0.40
codegen_flags: <defaults>
</compile_context>

<pallas_src>
import numpy as np
import jax
import jax.numpy as jnp
from jax import lax
from jax.experimental import pallas as pl
from jax.experimental.pallas import tpu as pltpu


def create_gaussian_kernel(kernel_size: int, cutoff: float) -> np.ndarray:
    """Matches PyTorch create_gaussian_kernel: normalized 2D gaussian."""
    center = kernel_size // 2
    k = np.zeros((kernel_size, kernel_size), dtype=np.float32)
    for i in range(kernel_size):
        for j in range(kernel_size):
            d = (i - center) ** 2 + (j - center) ** 2
            k[i, j] = np.exp(-d / (2.0 * cutoff ** 2))
    return (k / k.sum()).astype(np.float32)


def make_bandpass_weights(low_cutoff: float, high_cutoff: float, kernel_size: int = 3):
    lo = create_gaussian_kernel(kernel_size, low_cutoff)    # (K,K)
    hi = create_gaussian_kernel(kernel_size, high_cutoff)   # (K,K)
    # PyTorch stacks the same 2D kernel across the 3 input channels -> (3,K,K)
    lo3 = np.stack([lo] * 3, axis=0)
    hi3 = np.stack([hi] * 3, axis=0)
    return lo3, hi3


def bandpass_pallas(x: jax.Array, w_low: np.ndarray, w_high: np.ndarray,
                    kernel_size: int) -> jax.Array:
    """x: (B, C=3, H, W) float32 -> (B, 1, H, W) float32."""
    if x.ndim == 3:
        # PyTorch 3-D branch: unsqueeze(0), same batched math -> (1,1,H,W).
        return bandpass_pallas(x[None], w_low, w_high, kernel_size)

    B, C, H, W = x.shape
    K = kernel_size
    P = K // 2
    Hp, Wp = H + 2 * P, W + 2 * P

    w_low = np.asarray(w_low, dtype=np.float32)
    w_high = np.asarray(w_high, dtype=np.float32)
    # The channel-pre-sum / centre-tap-fold optimizations are only valid
    # because the module stacks one identical 2-D kernel across all input
    # channels -- guard that assumption.
    assert all(np.array_equal(w_low[c], w_low[0]) for c in range(C))
    assert all(np.array_equal(w_high[c], w_high[0]) for c in range(C))
    w2d = (w_low[0] + w_high[0]).astype(np.float64)              # (K,K)
    # Bake taps as immediates (trace-time constants captured in the closure).
    taps = [[float(w2d[i, j]) for j in range(K)] for i in range(K)]
    # Fold the channel mean into the centre tap: the un-shifted (di=P, dj=P)
    # slice of the zero-padded slab is exactly the interior channel sum, so
    # subtracting mean_c(x) == subtracting (1/C) * that slice.  Exact.
    taps[P][P] = taps[P][P] - 1.0 / float(C)

    # Lane-pack N images per grid step into one (Hp, N*Wp) slab.
    N = max(1, min(B, 128 // Wp))
    G = -(-B // N)                    # ceil(B / N) grid steps
    B_pad = G * N
    if B_pad != B:
        x = jnp.concatenate(
            [x, jnp.zeros((B_pad - B, C, H, W), x.dtype)], axis=0)

    Wslab = N * Wp                    # packed slab width
    Wacc = Wslab - 2 * P              # width of the shifted-slice accumulator

    def kernel(x_ref, o_ref, xsum_ref):
        # x_ref   : VMEM (N, C, H, W)   un-padded input tile (N batch images)
        # o_ref   : VMEM (1, H, N*W)    packed output slab (unpacked outside)
        # xsum_ref: VMEM (Hp, N*Wp)     zero-bordered channel-sum scratch
        @pl.when(pl.program_id(0) == 0)
        def _():
            # Interior bands are overwritten every grid step and the halo
            # rows/cols are never written, so one zero-fill suffices.
            xsum_ref[...] = jnp.zeros((Hp, Wslab), jnp.float32)

        # Per-image channel sum into its own halo-separated band.
        # (If the caller's data is bf16, drop the wrapper astype and the
        #  upcast here halves input HBM traffic.)
        for n in range(N):
            xsum = x_ref[n, 0, :, :]
            for c in range(1, C):
                xsum = xsum + x_ref[n, c, :, :]
            xsum_ref[P:P + H, n * Wp + P:n * Wp + P + W] = \
                xsum.astype(jnp.float32)

        # One K*K shifted multiply-accumulate sweep over the packed slab.
        # The channel mean is already folded into taps[P][P].
        acc = taps[0][0] * xsum_ref[0:H, 0:Wacc]
        for di in range(K):
            for dj in range(K):
                if di == 0 and dj == 0:
                    continue
                acc = acc + taps[di][dj] * xsum_ref[di:di + H, dj:dj + Wacc]

        # acc[:, n*Wp : n*Wp + W] is image n's (conv - mean) result.
        for n in range(N):
            o_ref[0, :, n * W:(n + 1) * W] = acc[:, n * Wp:n * Wp + W]

    out_packed = pl.pallas_call(
        kernel,
        out_shape=jax.ShapeDtypeStruct((G, H, N * W), jnp.float32),
        grid=(G,),
        in_specs=[pl.BlockSpec((N, C, H, W), lambda g: (g, 0, 0, 0))],
        out_specs=pl.BlockSpec((1, H, N * W), lambda g: (g, 0, 0)),
        scratch_shapes=[pltpu.VMEM((Hp, Wslab), jnp.float32)],
        compiler_params=pltpu.CompilerParams(
            dimension_semantics=("parallel",)),
    )(x.astype(jnp.float32))

    # Unpack the lane-packed slab back to (B, 1, H, W).
    out = (out_packed.reshape(G, H, N, W)
           .transpose(0, 2, 1, 3)
           .reshape(B_pad, H, W))
    return out[:B, None, :, :]


def bandpass_reference(x: jax.Array, w_low: np.ndarray, w_high: np.ndarray,
                       kernel_size: int) -> jax.Array:
    """Pure-JAX reference mirroring the PyTorch forward (4-D branch)."""
    P = kernel_size // 2
    w4 = jnp.asarray(w_low + w_high, dtype=jnp.float32)[None]   # (1,3,K,K)
    conv = lax.conv_general_dilated(
        x.astype(jnp.float32), w4, window_strides=(1, 1),
        padding=[(P, P), (P, P)],
        dimension_numbers=("NCHW", "OIHW", "NCHW"))
    return conv - x.mean(axis=1, keepdims=True)


if __name__ == "__main__":
    # BandPassFilter(low_cutoff=2.0, high_cutoff=0.5, kernel_size=3)
    LOW_CUTOFF, HIGH_CUTOFF, KSIZE = 2.0, 0.5, 3
    w_low, w_high = make_bandpass_weights(LOW_CUTOFF, HIGH_CUTOFF, KSIZE)

    # Conv weights are (1,3,K,K) so the input must have 3 channels (NCHW).
    B, C, H, W = 2, 3, 16, 16
    key = jax.random.PRNGKey(0)
    x = jax.random.normal(key, (B, C, H, W), dtype=jnp.float32)

    out = bandpass_pallas(x, w_low, w_high, KSIZE)
    out = jax.block_until_ready(out)

    ref = jax.block_until_ready(bandpass_reference(x, w_low, w_high, KSIZE))
    assert out.shape == (B, 1, H, W)
    np.testing.assert_allclose(np.asarray(out), np.asarray(ref),
                               rtol=1e-5, atol=1e-5)
    print("KERNEL_OK")
</pallas_src>

<mosaic_0001>
module attributes {stable_mosaic.version = 11 : i64} {
  func.func @kernel(%arg0: i32, %arg1: memref<2x3x16x16xf32, #tpu.memory_space<vmem>>, %arg2: memref<1x16x32xf32, #tpu.memory_space<vmem>>, %arg3: memref<18x36xf32, #tpu.memory_space<vmem>>) attributes {dimension_semantics = [#tpu.dimension_semantics<parallel>], iteration_bounds = array<i64: 1>, scalar_prefetch = 0 : i64, scratch_operands = 1 : i64, tpu.core_type = #tpu.core_type<tc>, window_params = [{transform_indices = @transform_0, window_bounds = array<i64: 2, 3, 16, 16>}, {transform_indices = @transform_1, window_bounds = array<i64: 1, 16, 32>}]} {
    %c0_i32 = arith.constant 0 : i32
    %0 = arith.cmpi eq, %arg0, %c0_i32 : i32
    %1 = arith.extui %0 : i1 to i32
    %c0_i32_0 = arith.constant 0 : i32
    %2 = arith.cmpi ne, %1, %c0_i32_0 : i32
    scf.if %2 {
      %cst_56 = arith.constant 0.000000e+00 : f32
      %64 = vector.broadcast %cst_56 : f32 to vector<18x36xf32>
      %c0_57 = arith.constant 0 : index
      %c0_58 = arith.constant 0 : index
      %65 = vector.load %arg3[%c0_57, %c0_58] : memref<18x36xf32, #tpu.memory_space<vmem>>, vector<18x36xf32>
      tpu.vector_store %arg3[%c0_57, %c0_58], %64 {strides = array<i32>} : memref<18x36xf32, #tpu.memory_space<vmem>>, vector<18x36xf32>,
    } else {
    }
    %c0 = arith.constant 0 : index
    %c0_1 = arith.constant 0 : index
    %c0_2 = arith.constant 0 : index
    %c0_3 = arith.constant 0 : index
    %3 = vector.load %arg1[%c0, %c0_1, %c0_2, %c0_3] : memref<2x3x16x16xf32, #tpu.memory_space<vmem>>, vector<1x1x16x16xf32>
    %4 = vector.shape_cast %3 : vector<1x1x16x16xf32> to vector<16x16xf32>
    %c0_4 = arith.constant 0 : index
    %c1 = arith.constant 1 : index
    %c0_5 = arith.constant 0 : index
    %c0_6 = arith.constant 0 : index
    %5 = vector.load %arg1[%c0_4, %c1, %c0_5, %c0_6] : memref<2x3x16x16xf32, #tpu.memory_space<vmem>>, vector<1x1x16x16xf32>
    %6 = vector.shape_cast %5 : vector<1x1x16x16xf32> to vector<16x16xf32>
    %7 = arith.addf %4, %6 : vector<16x16xf32>
    %c0_7 = arith.constant 0 : index
    %c2 = arith.constant 2 : index
    %c0_8 = arith.constant 0 : index
    %c0_9 = arith.constant 0 : index
    %8 = vector.load %arg1[%c0_7, %c2, %c0_8, %c0_9] : memref<2x3x16x16xf32, #tpu.memory_space<vmem>>, vector<1x1x16x16xf32>
    %9 = vector.shape_cast %8 : vector<1x1x16x16xf32> to vector<16x16xf32>
    %10 = arith.addf %7, %9 : vector<16x16xf32>
    %c1_10 = arith.constant 1 : index
    %c1_11 = arith.constant 1 : index
    %11 = vector.load %arg3[%c1_10, %c1_11] : memref<18x36xf32, #tpu.memory_space<vmem>>, vector<16x16xf32>
    tpu.vector_store %arg3[%c1_10, %c1_11], %10 {strides = array<i32>} : memref<18x36xf32, #tpu.memory_space<vmem>>, vector<16x16xf32>,
    %c1_12 = arith.constant 1 : index
    %c0_13 = arith.constant 0 : index
    %c0_14 = arith.constant 0 : index
    %c0_15 = arith.constant 0 : index
    %12 = vector.load %arg1[%c1_12, %c0_13, %c0_14, %c0_15] : memref<2x3x16x16xf32, #tpu.memory_space<vmem>>, vector<1x1x16x16xf32>
    %13 = vector.shape_cast %12 : vector<1x1x16x16xf32> to vector<16x16xf32>
    %c1_16 = arith.constant 1 : index
    %c1_17 = arith.constant 1 : index
    %c0_18 = arith.constant 0 : index
    %c0_19 = arith.constant 0 : index
    %14 = vector.load %arg1[%c1_16, %c1_17, %c0_18, %c0_19] : memref<2x3x16x16xf32, #tpu.memory_space<vmem>>, vector<1x1x16x16xf32>
    %15 = vector.shape_cast %14 : vector<1x1x16x16xf32> to vector<16x16xf32>
    %16 = arith.addf %13, %15 : vector<16x16xf32>
    %c1_20 = arith.constant 1 : index
    %c2_21 = arith.constant 2 : index
    %c0_22 = arith.constant 0 : index
    %c0_23 = arith.constant 0 : index
    %17 = vector.load %arg1[%c1_20, %c2_21, %c0_22, %c0_23] : memref<2x3x16x16xf32, #tpu.memory_space<vmem>>, vector<1x1x16x16xf32>
    %18 = vector.shape_cast %17 : vector<1x1x16x16xf32> to vector<16x16xf32>
    %19 = arith.addf %16, %18 : vector<16x16xf32>
    %c1_24 = arith.constant 1 : index
    %c19 = arith.constant 19 : index
    %20 = vector.load %arg3[%c1_24, %c19] : memref<18x36xf32, #tpu.memory_space<vmem>>, vector<16x16xf32>
    tpu.vector_store %arg3[%c1_24, %c19], %19 {strides = array<i32>} : memref<18x36xf32, #tpu.memory_space<vmem>>, vector<16x16xf32>,
    %c0_25 = arith.constant 0 : index
    %c0_26 = arith.constant 0 : index
    %21 = vector.load %arg3[%c0_25, %c0_26] : memref<18x36xf32, #tpu.memory_space<vmem>>, vector<16x34xf32>
    %cst = arith.constant 0.113211796 : f32
    %22 = vector.broadcast %cst : f32 to vector<16x34xf32>
    %23 = arith.mulf %22, %21 : vector<16x34xf32>
    %c0_27 = arith.constant 0 : index
    %c1_28 = arith.constant 1 : index
    %24 = vector.load %arg3[%c0_27, %c1_28] : memref<18x36xf32, #tpu.memory_space<vmem>>, vector<16x34xf32>
    %cst_29 = arith.constant 0.19925113 : f32
    %25 = vector.broadcast %cst_29 : f32 to vector<16x34xf32>
    %26 = arith.mulf %25, %24 : vector<16x34xf32>
    %27 = arith.addf %23, %26 : vector<16x34xf32>
    %c0_30 = arith.constant 0 : index
    %c2_31 = arith.constant 2 : index
    %28 = vector.load %arg3[%c0_30, %c2_31] : memref<18x36xf32, #tpu.memory_space<vmem>>, vector<16x34xf32>
    %cst_32 = arith.constant 0.113211796 : f32
    %29 = vector.broadcast %cst_32 : f32 to vector<16x34xf32>
    %30 = arith.mulf %29, %28 : vector<16x34xf32>
    %31 = arith.addf %27, %30 : vector<16x34xf32>
    %c1_33 = arith.constant 1 : index
    %c0_34 = arith.constant 0 : index
    %32 = vector.load %arg3[%c1_33, %c0_34] : memref<18x36xf32, #tpu.memory_space<vmem>>, vector<16x34xf32>
    %cst_35 = arith.constant 0.19925113 : f32
    %33 = vector.broadcast %cst_35 : f32 to vector<16x34xf32>
    %34 = arith.mulf %33, %32 : vector<16x34xf32>
    %35 = arith.addf %31, %34 : vector<16x34xf32>
    %c1_36 = arith.constant 1 : index
    %c1_37 = arith.constant 1 : index
    %36 = vector.load %arg3[%c1_36, %c1_37] : memref<18x36xf32, #tpu.memory_space<vmem>>, vector<16x34xf32>
    %cst_38 = arith.constant 0.416814834 : f32
    %37 = vector.broadcast %cst_38 : f32 to vector<16x34xf32>
    %38 = arith.mulf %37, %36 : vector<16x34xf32>
    %39 = arith.addf %35, %38 : vector<16x34xf32>
    %c1_39 = arith.constant 1 : index
    %c2_40 = arith.constant 2 : index
    %40 = vector.load %arg3[%c1_39, %c2_40] : memref<18x36xf32, #tpu.memory_space<vmem>>, vector<16x34xf32>
    %cst_41 = arith.constant 0.19925113 : f32
    %41 = vector.broadcast %cst_41 : f32 to vector<16x34xf32>
    %42 = arith.mulf %41, %40 : vector<16x34xf32>
    %43 = arith.addf %39, %42 : vector<16x34xf32>
    %c2_42 = arith.constant 2 : index
    %c0_43 = arith.constant 0 : index
    %44 = vector.load %arg3[%c2_42, %c0_43] : memref<18x36xf32, #tpu.memory_space<vmem>>, vector<16x34xf32>
    %cst_44 = arith.constant 0.113211796 : f32
    %45 = vector.broadcast %cst_44 : f32 to vector<16x34xf32>
    %46 = arith.mulf %45, %44 : vector<16x34xf32>
    %47 = arith.addf %43, %46 : vector<16x34xf32>
    %c2_45 = arith.constant 2 : index
    %c1_46 = arith.constant 1 : index
    %48 = vector.load %arg3[%c2_45, %c1_46] : memref<18x36xf32, #tpu.memory_space<vmem>>, vector<16x34xf32>
    %cst_47 = arith.constant 0.19925113 : f32
    %49 = vector.broadcast %cst_47 : f32 to vector<16x34xf32>
    %50 = arith.mulf %49, %48 : vector<16x34xf32>
    %51 = arith.addf %47, %50 : vector<16x34xf32>
    %c2_48 = arith.constant 2 : index
    %c2_49 = arith.constant 2 : index
    %52 = vector.load %arg3[%c2_48, %c2_49] : memref<18x36xf32, #tpu.memory_space<vmem>>, vector<16x34xf32>
    %cst_50 = arith.constant 0.113211796 : f32
    %53 = vector.broadcast %cst_50 : f32 to vector<16x34xf32>
    %54 = arith.mulf %53, %52 : vector<16x34xf32>
    %55 = arith.addf %51, %54 : vector<16x34xf32>
    %56 = vector.extract_strided_slice %55 {offsets = [0, 0], sizes = [16, 16], strides = [1, 1]} : vector<16x34xf32> to vector<16x16xf32>
    %c0_51 = arith.constant 0 : index
    %c0_52 = arith.constant 0 : index
    %c0_53 = arith.constant 0 : index
    %57 = vector.load %arg2[%c0_51, %c0_52, %c0_53] : memref<1x16x32xf32, #tpu.memory_space<vmem>>, vector<1x16x16xf32>
    %58 = vector.shape_cast %57 : vector<1x16x16xf32> to vector<16x16xf32>
    %59 = vector.shape_cast %56 : vector<16x16xf32> to vector<1x16x16xf32>
    tpu.vector_store %arg2[%c0_51, %c0_52, %c0_53], %59 {strides = array<i32>} : memref<1x16x32xf32, #tpu.memory_space<vmem>>, vector<1x16x16xf32>,
    %60 = vector.extract_strided_slice %55 {offsets = [0, 18], sizes = [16, 16], strides = [1, 1]} : vector<16x34xf32> to vector<16x16xf32>
    %c0_54 = arith.constant 0 : index
    %c0_55 = arith.constant 0 : index
    %c16 = arith.constant 16 : index
    %61 = vector.load %arg2[%c0_54, %c0_55, %c16] : memref<1x16x32xf32, #tpu.memory_space<vmem>>, vector<1x16x16xf32>
    %62 = vector.shape_cast %61 : vector<1x16x16xf32> to vector<16x16xf32>
    %63 = vector.shape_cast %60 : vector<16x16xf32> to vector<1x16x16xf32>
    tpu.vector_store %arg2[%c0_54, %c0_55, %c16], %63 {strides = array<i32>} : memref<1x16x32xf32, #tpu.memory_space<vmem>>, vector<1x16x16xf32>,
    return
  }
  func.func @transform_0(%arg0: i32) -> (i32, i32, i32, i32) {
    %c0_i32 = arith.constant 0 : i32
    %c0_i32_0 = arith.constant 0 : i32
    %c0_i32_1 = arith.constant 0 : i32
    %c0_i32_2 = arith.constant 0 : i32
    return %arg0, %c0_i32, %c0_i32_0, %c0_i32_1 : i32, i32, i32, i32
  }
  func.func @transform_1(%arg0: i32) -> (i32, i32, i32) {
    %c0_i32 = arith.constant 0 : i32
    %c0_i32_0 = arith.constant 0 : i32
    %c0_i32_1 = arith.constant 0 : i32
    return %arg0, %c0_i32, %c0_i32_0 : i32, i32, i32
  }
}

</mosaic_0001>

<llo_original>
// kernel: tpu_custom_call.1
$region0: #{tpu_custom_call.1}
  #allocation0 [shape = 'u32[]', space=smem, size = 0x4, offset = 0x4, fixed_abs, tag = 'smem constant byte address 0x4 - core index']
  #allocation1 [shape = 'u32[144,128]{1,0:T(1,128)}', space=vmem, size = 0x12000, scoped, tag = 'internal scratch']
  #allocation2 [shape = 'f32[18,36]{1,0:T(8,128)}', space=vmem, size = 0x3000, scoped, tag = 'scratch operand']
  %s0 = inlined_call_operand.hbm [shape: f32[2,3,16,16], index: 0, kind: input, shape index: {}]
  %s1 = inlined_call_operand.hbm [shape: f32[1,16,32], index: 1, kind: output, shape index: {}]
  %s2 = sld [smem:[#allocation0]]
  $region22: #{tpu_custom_call.1} parent=0
    _
  %s4 = ssub.s32 1, %s2
  %s5 = scalar_select 0, %s4, %s2
  $region1: #{tpu_custom_call.1} parent=0
    #allocation3 [shape = 'u8[49152]{0}', space=vmem, size = 0xc000, scoped, tag = 'input window, operand 0, single buffered']
    #allocation4 [shape = 's32[1]{0}', space=sflag, size = 0x4, scoped, tag = 'scoped memory for tpu_custom_call.1']
    #allocation5 [shape = 's32[1]{0}', space=sflag, size = 0x4, scoped, tag = 'scoped memory for tpu_custom_call.1']
    #allocation6 [shape = 'u8[8192]{0}', space=vmem, size = 0x2000, scoped, tag = 'output window, operand 0, single buffered']
    %6 = vsyncpa [#allocation4], 0
    %7 = vsyncpa [#allocation5], 0
    // Predicated region
    $region2: #{tpu_custom_call.1} parent=1 // pred_check
      _
    $region3: #{tpu_custom_call.1} parent=1 // pred_check_branch
      %9 = sbr.rel (0) target = $region5
    $region4: #{tpu_custom_call.1} parent=1 // pred_region
      %s11 = ssub.s32 1536, 1536
      %12 = vsyncadd [#allocation4], %s11
      %s13 = sshll.u32 [#allocation3], 4
      %s14 = int_to_ptr.vmem [resolvable:$true] %s13
      %19 = dma.hbm_to_vmem [thread:$0]  %s0, 1536, %s14, [#allocation4], 128, 128, 8
    $region5: #{tpu_custom_call.1} parent=1 // pred_fallthru
      _
    // Predicated region
    $region6: #{tpu_custom_call.1} parent=1 // pred_check
      _
    $region7: #{tpu_custom_call.1} parent=1 // pred_check_branch
      %21 = sbr.rel (0) target = $region9
    $region8: #{tpu_custom_call.1} parent=1 // pred_region
      %22 = dma.done [#allocation4], 1536
    $region9: #{tpu_custom_call.1} parent=1 // pred_fallthru
      _
    %p23 = scmp.eq.s32.totalorder 0, 0
    // Predicated region
    $region10: #{tpu_custom_call.1} parent=1 // pred_check
      %p24 = pneg %p23
    $region11: #{tpu_custom_call.1} parent=1 // pred_check_branch
      %26 = sbr.rel (%p24) target = $region13
    $region12: #{tpu_custom_call.1} parent=1 // pred_region
      %vm27 = vcmask 293888
      %28 = vst.msk [vmem:[#allocation2] sm:$0xff] %vm27, 0.0
      %29 = vst.msk [vmem:[#allocation2 + $0x8] sm:$0xff] %vm27, 0.0
      %vm30 = vcmask 287744
      %31 = vst.msk [vmem:[#allocation2 + $0x10] sm:$0x3] %vm30, 0.0
    $region13: #{tpu_custom_call.1} parent=1 // pred_fallthru
      _
    %v32 = vld [vmem:[#allocation3] sm:$0xff]
    %v33 = vld [vmem:[#allocation3 + $0x8] sm:$0xff]
    %s34 = scalar_lea.vmem [#allocation3], 16
    %v35 = vld [vmem:[%s34] sm:$0xff]
    %v36 = vld [vmem:[%s34 + $0x8] sm:$0xff]
    %v37 = vadd.f32 %v32, %v35
    %v38 = vadd.f32 %v33, %v36
    %s39 = scalar_lea.vmem [#allocation3], 32
    %v40 = vld [vmem:[%s39] sm:$0xff]
    %v41 = vld [vmem:[%s39 + $0x8] sm:$0xff]
    %v42 = vadd.f32 %v37, %v40
    %v43 = vadd.f32 %v38, %v41
    %46 = vrot.lane.b32.xlu0 %v42, 1
    %v47 = vpop.permute.xlu0 %46
    %48 = vrot.lane.b32.xlu0 %v43, 1
    %v49 = vpop.permute.xlu0 %48
    %vm52 = vcmask 138248
    %53 = vst.msk [vmem:[#allocation2 + $0x1] sm:$0xff] %vm52, %v47
    %54 = vst.msk [vmem:[#allocation2 + $0x9] sm:$0xff] %vm52, %v49
    %s55 = scalar_lea.vmem [#allocation3], 48
    %v56 = vld [vmem:[%s55] sm:$0xff]
    %v57 = vld [vmem:[%s55 + $0x8] sm:$0xff]
    %s58 = scalar_lea.vmem [#allocation3], 64
    %v59 = vld [vmem:[%s58] sm:$0xff]
    %v60 = vld [vmem:[%s58 + $0x8] sm:$0xff]
    %v61 = vadd.f32 %v56, %v59
    %v62 = vadd.f32 %v57, %v60
    %s63 = scalar_lea.vmem [#allocation3], 80
    %v64 = vld [vmem:[%s63] sm:$0xff]
    %v65 = vld [vmem:[%s63 + $0x8] sm:$0xff]
    %v66 = vadd.f32 %v61, %v64
    %v67 = vadd.f32 %v62, %v65
    %70 = vrot.lane.b32.xlu0 %v66, 19
    %v71 = vpop.permute.xlu0 %70
    %72 = vrot.lane.b32.xlu0 %v67, 19
    %v73 = vpop.permute.xlu0 %72
    %vm76 = vcmask 285848
    %77 = vst.msk [vmem:[#allocation2 + $0x1] sm:$0xff] %vm76, %v71
    %78 = vst.msk [vmem:[#allocation2 + $0x9] sm:$0xff] %vm76, %v73
    %v79 = vld [vmem:[#allocation2] sm:$0xff]
    %v80 = vld [vmem:[#allocation2 + $0x8] sm:$0xff]
    %v81 = vmul.f32 %v79, 0.113211796
    %v82 = vmul.f32 %v80, 0.113211796
    %v83 = vmul.f32 %v79, 0.19925113
    %v84 = vmul.f32 %v80, 0.19925113
    %87 = vrot.lane.b32.xlu0 %v83, 127
    %v88 = vpop.permute.xlu0 %87
    %89 = vrot.lane.b32.xlu0 %v84, 127
    %v90 = vpop.permute.xlu0 %89
    %v93 = vadd.f32 %v81, %v88
    %v94 = vadd.f32 %v82, %v90
    %97 = vrot.lane.b32.xlu0 %v81, 126
    %v98 = vpop.permute.xlu0 %97
    %99 = vrot.lane.b32.xlu0 %v82, 126
    %v100 = vpop.permute.xlu0 %99
    %v103 = vadd.f32 %v93, %v98
    %v104 = vadd.f32 %v94, %v100
    %v105 = vld [vmem:[#allocation2 + $0x1] sm:$0xff]
    %v106 = vld [vmem:[#allocation2 + $0x9] sm:$0xff]
    %v107 = vmul.f32 %v105, 0.19925113
    %v108 = vmul.f32 %v106, 0.19925113
    %v109 = vadd.f32 %v103, %v107
    %v110 = vadd.f32 %v104, %v108
    %v111 = vmul.f32 %v105, 0.41681483
    %v112 = vmul.f32 %v106, 0.41681483
    %115 = vrot.lane.b32.xlu0 %v111, 127
    %v116 = vpop.permute.xlu0 %115
    %117 = vrot.lane.b32.xlu0 %v112, 127
    %v118 = vpop.permute.xlu0 %117
    %v121 = vadd.f32 %v109, %v116
    %v122 = vadd.f32 %v110, %v118
    %125 = vrot.lane.b32.xlu0 %v107, 126
    %v126 = vpop.permute.xlu0 %125
    %127 = vrot.lane.b32.xlu0 %v108, 126
    %v128 = vpop.permute.xlu0 %127
    %v131 = vadd.f32 %v121, %v126
    %v132 = vadd.f32 %v122, %v128
    %v133 = vld [vmem:[#allocation2 + $0x2] sm:$0xff]
    %v134 = vld [vmem:[#allocation2 + $0xa] sm:$0xff]
    %v135 = vmul.f32 %v133, 0.113211796
    %v136 = vmul.f32 %v134, 0.113211796
    %v137 = vadd.f32 %v131, %v135
    %v138 = vadd.f32 %v132, %v136
    %v139 = vmul.f32 %v133, 0.19925113
    %v140 = vmul.f32 %v134, 0.19925113
    %143 = vrot.lane.b32.xlu0 %v139, 127
    %v144 = vpop.permute.xlu0 %143
    %145 = vrot.lane.b32.xlu0 %v140, 127
    %v146 = vpop.permute.xlu0 %145
    %v149 = vadd.f32 %v137, %v144
    %v150 = vadd.f32 %v138, %v146
    %153 = vrot.lane.b32.xlu0 %v135, 126
    %v154 = vpop.permute.xlu0 %153
    %155 = vrot.lane.b32.xlu0 %v136, 126
    %v156 = vpop.permute.xlu0 %155
    %v159 = vadd.f32 %v149, %v154
    %v160 = vadd.f32 %v150, %v156
    %vm161 = vcmask 130048
    %162 = vst.msk [vmem:[#allocation6] sm:$0xff] %vm161, %v159
    %163 = vst.msk [vmem:[#allocation6 + $0x8] sm:$0xff] %vm161, %v160
    %166 = vrot.lane.b32.xlu0 %v159, 126
    %v167 = vpop.permute.xlu0 %166
    %168 = vrot.lane.b32.xlu0 %v160, 126
    %v169 = vpop.permute.xlu0 %168
    %vm172 = vcmask 261248
    %173 = vst.msk [vmem:[#allocation6] sm:$0xff] %vm172, %v167
    %174 = vst.msk [vmem:[#allocation6 + $0x8] sm:$0xff] %vm172, %v169
    // Predicated region
    $region14: #{tpu_custom_call.1} parent=1 // pred_check
      _
    $region15: #{tpu_custom_call.1} parent=1 // pred_check_branch
      %176 = sbr.rel (0) target = $region17
    $region16: #{tpu_custom_call.1} parent=1 // pred_region
      %s178 = ssub.s32 256, 256
      %179 = vsyncadd [#allocation5], %s178
      %s180 = sshll.u32 [#allocation6], 4
      %s181 = int_to_ptr.vmem [resolvable:$true] %s180
      %186 = dma.vmem_to_hbm [thread:$0]  %s181, 256, %s1, [#allocation5], 128, 128, 8
    $region17: #{tpu_custom_call.1} parent=1 // pred_fallthru
      _
    // Predicated region
    $region18: #{tpu_custom_call.1} parent=1 // pred_check
      _
    $region19: #{tpu_custom_call.1} parent=1 // pred_check_branch
      %188 = sbr.rel (0) target = $region21
    $region20: #{tpu_custom_call.1} parent=1 // pred_region
      %189 = dma.done [#allocation5], 256
    $region21: #{tpu_custom_call.1} parent=1 // pred_fallthru
      _
    %190 = vsyncpa [#allocation4], 1
    %191 = vsyncpa [#allocation5], 1

</llo_original>
